<compile_context>
chip_gen: v7x
topology: tpu7x:2x2x1
jax: 0.10.0
libtpu: 0.0.40
codegen_flags: <defaults>
</compile_context>

<pallas_src>
import jax
import jax.numpy as jnp
from jax import lax
from jax.experimental import pallas as pl
from jax.experimental.pallas import tpu as pltpu


_NEG_INF = -1000000000.0   # matches the module's masked_fill value exactly


def _make_attention_kernel(scale, mxu_dtype, emit_soft):
    """Kernel body closed over static config.

    Block shapes per grid step (b, qi) -- batch dim squeezed, refs are 2-D:
      q_ref    : (TQ, D)   query tile (native dtype)
      k_ref    : (S,  D)   keys, resident across query tiles
      v_ref    : (S,  D)   values, resident across query tiles
      mask_ref : (TQ, S)   int8, nonzero = masked
      out_ref  : (TQ, D)   float32
      soft_ref : (TQ, S)   only when emit_soft
    """

    def kernel(q_ref, k_ref, v_ref, mask_ref, out_ref, *soft_refs):
        # Fold the 1/d_k^2 scale into Q (TQ*D multiplies instead of TQ*S).
        # Scale in f32, then cast once to the MXU feed dtype.
        q = q_ref[...].astype(jnp.float32) * scale
        qm = q.astype(mxu_dtype)
        km = k_ref[...].astype(mxu_dtype)

        # scores = (Q * scale) @ K^T  -- NT dot, f32 accumulation on the MXU.
        scores = lax.dot_general(
            qm, km, (((1,), (1,)), ((), ())),
            preferred_element_type=jnp.float32)

        # masked_fill_(attn_mask, -1e9)
        scores = jnp.where(mask_ref[...] != 0, jnp.float32(_NEG_INF), scores)

        # Numerically stable softmax over the key axis (the full key extent S
        # is inside this block, so no online-softmax carry is needed).  Fully
        # masked rows give uniform 1/S, same as PyTorch masked_fill + softmax.
        m = jnp.max(scores, axis=-1, keepdims=True)
        p = jnp.exp(scores - m)
        l = jnp.sum(p, axis=-1, keepdims=True)
        # Exact reciprocal of a (TQ, 1) column: negligible cost, and keeps the
        # *returned* soft rows summing to 1 (approx=True would put its error
        # into an output, not just an internal value).
        soft = p * pl.reciprocal(l, approx=False)

        # out = soft @ V  -- NN dot, f32 accumulation on the MXU.
        out = lax.dot_general(
            soft.astype(mxu_dtype), v_ref[...].astype(mxu_dtype),
            (((1,), (0,)), ((), ())),
            preferred_element_type=jnp.float32)

        out_ref[...] = out.astype(out_ref.dtype)
        if emit_soft:
            soft_refs[0][...] = soft.astype(soft_refs[0].dtype)

    return kernel


def _vmem_capacity_and_kind():
    """Best-effort (capacity_bytes, device_kind) for the current TPU."""
    kind = ""
    try:
        kind = jax.devices()[0].device_kind.lower()
    except Exception:
        pass
    cap = None
    try:
        info = pltpu.get_tpu_info()
        for attr in ("vmem_capacity_bytes", "vmem_size_bytes", "vmem_bytes"):
            if hasattr(info, attr):
                cap = int(getattr(info, attr))
                break
    except Exception:
        cap = None
    if not cap:
        if "v7" in kind:
            cap = 64 * 2**20          # v7x: 64 MiB / TensorCore
        elif "v5" in kind or "v6" in kind:
            cap = 128 * 2**20         # v5e / v5p / v6e: 128 MiB
        else:
            cap = 64 * 2**20          # unknown: assume the tightest budget
    return cap, kind


def _vmem_estimate(tq, S, D, in_bytes, soft_bytes, emit_soft, mxu_bytes):
    """Rough per-step VMEM footprint: pipeline buffers + live intermediates."""
    blocks = 2 * tq * D * in_bytes            # Q (double-buffered)
    blocks += 2 * tq * S * 1                  # int8 mask
    blocks += 2 * tq * D * 4                  # f32 out
    if emit_soft:
        blocks += 2 * tq * S * soft_bytes     # soft
    blocks += 2 * 2 * S * D * in_bytes        # K + V (budget 2 bufs even if the
                                              # single-buffer hint is honored)
    # Live intermediates: scores/p in f32, mxu-dtype copies of p/Q/K/V, f32 out.
    interm = tq * S * (4 + 4 + mxu_bytes)
    interm += (S * D + tq * D) * mxu_bytes + tq * D * 4
    return blocks + interm


def _pick_query_tile(S, D, in_bytes, soft_bytes, emit_soft, mxu_bytes,
                     vmem_cap, kind):
    is_v5e = ("v5 lite" in kind) or ("v5e" in kind) or ("v5litepod" in kind)
    max_tq = 256 if is_v5e else 512           # v5e MXU is 128-wide; 256 is plenty
    if is_v5e and S >= 8192:
        max_tq = 128                          # keep scores/p spills small on v5e
    budget = int(0.55 * vmem_cap)             # leave headroom for compiler scratch

    candidates = [t for t in (512, 256, 128, 64, 32) if t <= max_tq and S % t == 0]
    for tq in candidates:
        if _vmem_estimate(tq, S, D, in_bytes, soft_bytes, emit_soft,
                          mxu_bytes) <= budget:
            return tq
    if candidates:                            # nothing fits: take the smallest tile
        return candidates[-1]
    return S                                  # tiny / odd S: whole-sequence block


def self_dot_attention(Q, K, V, attn_mask, *, return_soft=True,
                       soft_dtype=jnp.float32, mxu_dtype=None):
    """Q, K, V: [B, S, D]; attn_mask: [B, S, S] bool/int (nonzero = masked out).

    Returns (out, soft) like the PyTorch module (out is f32, soft is
    `soft_dtype`), or just `out` when return_soft=False (skips the dominant
    [B,S,S] HBM writeback).  `mxu_dtype` is the matmul feed dtype: default is
    bf16 when the inputs are f32 (what the v5e/v6e/v7x MXUs want); pass
    jnp.float32 for a precise path.
    """
    B, S, D = Q.shape
    assert K.shape == (B, S, D) and V.shape == (B, S, D)
    assert attn_mask.shape == (B, S, S)

    if mxu_dtype is None:
        mxu_dtype = jnp.bfloat16 if Q.dtype == jnp.float32 else Q.dtype
    mxu_dtype = jnp.dtype(mxu_dtype)
    soft_dtype = jnp.dtype(soft_dtype)

    scale = 1.0 / float(D) ** 2               # matches `/ K.size(-1) ** 2`
    mask_i8 = attn_mask.astype(jnp.int8)      # 4x less mask HBM traffic vs int32

    in_bytes = Q.dtype.itemsize
    soft_bytes = soft_dtype.itemsize
    mxu_bytes = mxu_dtype.itemsize
    vmem_cap, kind = _vmem_capacity_and_kind()

    TQ = _pick_query_tile(S, D, in_bytes, soft_bytes, return_soft, mxu_bytes,
                          vmem_cap, kind)
    n_q = S // TQ

    est = _vmem_estimate(TQ, S, D, in_bytes, soft_bytes, return_soft, mxu_bytes)
    vmem_limit = max(int(1.35 * est), 32 * 2**20)
    vmem_limit = min(vmem_limit, vmem_cap - 8 * 2**20)   # always leave headroom
    vmem_limit = max(vmem_limit, 16 * 2**20)

    kernel = _make_attention_kernel(scale, mxu_dtype, return_soft)

    q_spec = pl.BlockSpec((None, TQ, D), lambda b, qi: (b, qi, 0))
    mask_spec = pl.BlockSpec((None, TQ, S), lambda b, qi: (b, qi, 0))
    out_spec = pl.BlockSpec((None, TQ, D), lambda b, qi: (b, qi, 0))
    soft_spec = pl.BlockSpec((None, TQ, S), lambda b, qi: (b, qi, 0))

    if return_soft:
        out_shape = (jax.ShapeDtypeStruct((B, S, D), jnp.float32),
                     jax.ShapeDtypeStruct((B, S, S), soft_dtype))
        out_specs = (out_spec, soft_spec)
    else:
        out_shape = jax.ShapeDtypeStruct((B, S, D), jnp.float32)
        out_specs = out_spec

    flops = 4 * B * S * S * D                       # QK^T + PV
    bytes_accessed = (3 * B * S * D * in_bytes      # Q, K, V reads
                      + B * S * S                   # int8 mask read
                      + B * S * D * 4)              # out write
    if return_soft:
        bytes_accessed += B * S * S * soft_bytes    # soft write (dominant term)
    cost = pl.CostEstimate(flops=flops, transcendentals=B * S * S,
                           bytes_accessed=bytes_accessed)

    def _build_and_call(single_buffer_kv):
        kv_kwargs = {}
        if single_buffer_kv:
            # K/V block index only changes with the batch axis, so the second
            # pipeline buffer is pure VMEM waste (matters on v7x's 64 MiB/TC).
            kv_kwargs["pipeline_mode"] = pl.Buffered(1)
        kv_spec = pl.BlockSpec((None, S, D), lambda b, qi: (b, 0, 0), **kv_kwargs)
        call = pl.pallas_call(
            kernel,
            out_shape=out_shape,
            grid_spec=pltpu.PrefetchScalarGridSpec(
                num_scalar_prefetch=0,
                grid=(B, n_q),
                in_specs=[q_spec, kv_spec, kv_spec, mask_spec],
                out_specs=out_specs,
            ),
            compiler_params=pltpu.CompilerParams(
                dimension_semantics=("parallel", "parallel"),
                vmem_limit_bytes=int(vmem_limit),
            ),
            cost_estimate=cost,
        )
        return call(Q, K, V, mask_i8)

    try:
        return _build_and_call(True)
    except Exception:
        # pipeline_mode / pl.Buffered not supported on this jax version (or
        # rejected by lowering): fall back to default double-buffered K/V.
        return _build_and_call(False)


def _reference(Q, K, V, attn_mask):
    hp = lax.Precision.HIGHEST
    d_k = K.shape[-1]
    scores = jnp.einsum("bqd,bkd->bqk", Q, K, precision=hp) / float(d_k) ** 2
    scores = jnp.where(attn_mask, _NEG_INF, scores)
    soft = jax.nn.softmax(scores, axis=-1)
    out = jnp.einsum("bqk,bkd->bqd", soft, V, precision=hp)
    return out, soft


if __name__ == "__main__":
    key = jax.random.PRNGKey(0)
    kq, kk, kv, km = jax.random.split(key, 4)

    B, S, D = 2, 8, 32
    Q = jax.random.normal(kq, (B, S, D), dtype=jnp.float32)
    K = jax.random.normal(kk, (B, S, D), dtype=jnp.float32)
    V = jax.random.normal(kv, (B, S, D), dtype=jnp.float32)
    # Boolean attention mask: True = masked out.
    attn_mask = jax.random.bernoulli(km, p=0.25, shape=(B, S, S))

    ref_out, ref_soft = _reference(Q, K, V, attn_mask)

    # 1) Default production path (bf16 MXU feed, f32 softmax + outputs).
    out, soft = self_dot_attention(Q, K, V, attn_mask)
    jax.block_until_ready((out, soft))
    assert out.shape == (B, S, D) and soft.shape == (B, S, S)
    assert jnp.allclose(soft, ref_soft, atol=2e-3, rtol=2e-3)
    assert jnp.allclose(out, ref_out, atol=2e-2, rtol=2e-2)   # bf16 matmul tol

    # 2) Precise f32 MXU path: tighter check of the kernel math itself.
    out32, soft32 = self_dot_attention(Q, K, V, attn_mask, mxu_dtype=jnp.float32)
    jax.block_until_ready((out32, soft32))
    assert jnp.allclose(soft32, ref_soft, atol=2e-3, rtol=2e-3)
    assert jnp.allclose(out32, ref_out, atol=2e-3, rtol=2e-3)

    # 3) out-only variant (skips the [B,S,S] soft writeback entirely).
    out_only = self_dot_attention(Q, K, V, attn_mask, return_soft=False)
    jax.block_until_ready(out_only)
    assert out_only.shape == (B, S, D)
    assert jnp.allclose(out_only, ref_out, atol=2e-2, rtol=2e-2)

    print("KERNEL_OK")
</pallas_src>

<mosaic_0001>
module attributes {stable_mosaic.version = 11 : i64} {
  func.func @kernel(%arg0: i32, %arg1: i32, %arg2: memref<1x8x32xf32, #tpu.memory_space<vmem>>, %arg3: memref<1x8x32xf32, #tpu.memory_space<vmem>>, %arg4: memref<1x8x32xf32, #tpu.memory_space<vmem>>, %arg5: memref<1x8x8xi8, #tpu.memory_space<vmem>>, %arg6: memref<1x8x32xf32, #tpu.memory_space<vmem>>, %arg7: memref<1x8x8xf32, #tpu.memory_space<vmem>>) attributes {dimension_semantics = [#tpu.dimension_semantics<parallel>, #tpu.dimension_semantics<parallel>], iteration_bounds = array<i64: 2, 1>, scalar_prefetch = 0 : i64, scratch_operands = 0 : i64, tpu.core_type = #tpu.core_type<tc>, window_params = [{transform_indices = @transform_0, window_bounds = array<i64: 1, 8, 32>}, {pipeline_mode = #tpu.pipeline_mode<synchronous>, transform_indices = @transform_1, window_bounds = array<i64: 1, 8, 32>}, {pipeline_mode = #tpu.pipeline_mode<synchronous>, transform_indices = @transform_2, window_bounds = array<i64: 1, 8, 32>}, {transform_indices = @transform_3, window_bounds = array<i64: 1, 8, 8>}, {transform_indices = @transform_4, window_bounds = array<i64: 1, 8, 32>}, {transform_indices = @transform_5, window_bounds = array<i64: 1, 8, 8>}]} {
    %c0 = arith.constant 0 : index
    %c0_0 = arith.constant 0 : index
    %c0_1 = arith.constant 0 : index
    %0 = vector.load %arg2[%c0, %c0_0, %c0_1] : memref<1x8x32xf32, #tpu.memory_space<vmem>>, vector<1x8x32xf32>
    %1 = vector.shape_cast %0 : vector<1x8x32xf32> to vector<8x32xf32>
    %cst = arith.constant 9.765625E-4 : f32
    %2 = vector.broadcast %cst : f32 to vector<8x32xf32>
    %3 = arith.mulf %1, %2 : vector<8x32xf32>
    %4 = arith.truncf %3 : vector<8x32xf32> to vector<8x32xbf16>
    %c0_2 = arith.constant 0 : index
    %c0_3 = arith.constant 0 : index
    %c0_4 = arith.constant 0 : index
    %5 = vector.load %arg3[%c0_2, %c0_3, %c0_4] : memref<1x8x32xf32, #tpu.memory_space<vmem>>, vector<1x8x32xf32>
    %6 = vector.shape_cast %5 : vector<1x8x32xf32> to vector<8x32xf32>
    %7 = arith.truncf %6 : vector<8x32xf32> to vector<8x32xbf16>
    %cst_5 = arith.constant dense<0.000000e+00> : vector<8x8xf32>
    %8 = tpu.matmul %4, %7, %cst_5 {dimension_numbers = #tpu.dot_dimension_numbers<[1], [1], [0], [0], [0, 0, 1, 0], [], []>} : vector<8x32xbf16>, vector<8x32xbf16>, vector<8x8xf32> -> vector<8x8xf32>
    %c0_6 = arith.constant 0 : index
    %c0_7 = arith.constant 0 : index
    %c0_8 = arith.constant 0 : index
    %9 = vector.load %arg5[%c0_6, %c0_7, %c0_8] : memref<1x8x8xi8, #tpu.memory_space<vmem>>, vector<1x8x8xi8>
    %10 = vector.shape_cast %9 : vector<1x8x8xi8> to vector<8x8xi8>
    %c0_i8 = arith.constant 0 : i8
    %11 = vector.broadcast %c0_i8 : i8 to vector<8x8xi8>
    %12 = arith.cmpi ne, %10, %11 : vector<8x8xi8>
    %cst_9 = arith.constant -1.000000e+09 : f32
    %13 = vector.broadcast %cst_9 : f32 to vector<8x8xf32>
    %14 = arith.select %12, %13, %8 : vector<8x8xi1>, vector<8x8xf32>
    %cst_10 = arith.constant dense<0xFF800000> : vector<8xf32>
    %15 = vector.multi_reduction <maximumf>, %14, %cst_10 [1] : vector<8x8xf32> to vector<8xf32>
    %16 = vector.shape_cast %15 : vector<8xf32> to vector<8x1xf32>
    %17 = vector.broadcast %16 : vector<8x1xf32> to vector<8x8xf32>
    %18 = arith.subf %14, %17 : vector<8x8xf32>
    %19 = math.exp %18 : vector<8x8xf32>
    %cst_11 = arith.constant dense<0.000000e+00> : vector<8xf32>
    %20 = vector.multi_reduction <add>, %19, %cst_11 [1] : vector<8x8xf32> to vector<8xf32>
    %21 = vector.shape_cast %20 : vector<8xf32> to vector<8x1xf32>
    %22 = tpu.reciprocal %21 : vector<8x1xf32> -> vector<8x1xf32>
    %23 = vector.broadcast %22 : vector<8x1xf32> to vector<8x8xf32>
    %24 = arith.mulf %19, %23 : vector<8x8xf32>
    %25 = arith.truncf %24 : vector<8x8xf32> to vector<8x8xbf16>
    %c0_12 = arith.constant 0 : index
    %c0_13 = arith.constant 0 : index
    %c0_14 = arith.constant 0 : index
    %26 = vector.load %arg4[%c0_12, %c0_13, %c0_14] : memref<1x8x32xf32, #tpu.memory_space<vmem>>, vector<1x8x32xf32>
    %27 = vector.shape_cast %26 : vector<1x8x32xf32> to vector<8x32xf32>
    %28 = arith.truncf %27 : vector<8x32xf32> to vector<8x32xbf16>
    %cst_15 = arith.constant dense<0.000000e+00> : vector<8x32xf32>
    %29 = tpu.matmul %25, %28, %cst_15 {dimension_numbers = #tpu.dot_dimension_numbers<[1], [0], [0], [1], [0, 0, 1, 1], [], []>} : vector<8x8xbf16>, vector<8x32xbf16>, vector<8x32xf32> -> vector<8x32xf32>
    %c0_16 = arith.constant 0 : index
    %c0_17 = arith.constant 0 : index
    %c0_18 = arith.constant 0 : index
    %30 = vector.load %arg6[%c0_16, %c0_17, %c0_18] : memref<1x8x32xf32, #tpu.memory_space<vmem>>, vector<1x8x32xf32>
    %31 = vector.shape_cast %30 : vector<1x8x32xf32> to vector<8x32xf32>
    %32 = vector.shape_cast %29 : vector<8x32xf32> to vector<1x8x32xf32>
    tpu.vector_store %arg6[%c0_16, %c0_17, %c0_18], %32 {strides = array<i32>} : memref<1x8x32xf32, #tpu.memory_space<vmem>>, vector<1x8x32xf32>,
    %c0_19 = arith.constant 0 : index
    %c0_20 = arith.constant 0 : index
    %c0_21 = arith.constant 0 : index
    %33 = vector.load %arg7[%c0_19, %c0_20, %c0_21] : memref<1x8x8xf32, #tpu.memory_space<vmem>>, vector<1x8x8xf32>
    %34 = vector.shape_cast %33 : vector<1x8x8xf32> to vector<8x8xf32>
    %35 = vector.shape_cast %24 : vector<8x8xf32> to vector<1x8x8xf32>
    tpu.vector_store %arg7[%c0_19, %c0_20, %c0_21], %35 {strides = array<i32>} : memref<1x8x8xf32, #tpu.memory_space<vmem>>, vector<1x8x8xf32>,
    return
  }
  func.func @transform_0(%arg0: i32, %arg1: i32) -> (i32, i32, i32) {
    %c0_i32 = arith.constant 0 : i32
    %c0_i32_0 = arith.constant 0 : i32
    return %arg0, %arg1, %c0_i32 : i32, i32, i32
  }
  func.func @transform_1(%arg0: i32, %arg1: i32) -> (i32, i32, i32) {
    %c0_i32 = arith.constant 0 : i32
    %c0_i32_0 = arith.constant 0 : i32
    %c0_i32_1 = arith.constant 0 : i32
    return %arg0, %c0_i32, %c0_i32_0 : i32, i32, i32
  }
  func.func @transform_2(%arg0: i32, %arg1: i32) -> (i32, i32, i32) {
    %c0_i32 = arith.constant 0 : i32
    %c0_i32_0 = arith.constant 0 : i32
    %c0_i32_1 = arith.constant 0 : i32
    return %arg0, %c0_i32, %c0_i32_0 : i32, i32, i32
  }
  func.func @transform_3(%arg0: i32, %arg1: i32) -> (i32, i32, i32) {
    %c0_i32 = arith.constant 0 : i32
    %c0_i32_0 = arith.constant 0 : i32
    return %arg0, %arg1, %c0_i32 : i32, i32, i32
  }
  func.func @transform_4(%arg0: i32, %arg1: i32) -> (i32, i32, i32) {
    %c0_i32 = arith.constant 0 : i32
    %c0_i32_0 = arith.constant 0 : i32
    return %arg0, %arg1, %c0_i32 : i32, i32, i32
  }
  func.func @transform_5(%arg0: i32, %arg1: i32) -> (i32, i32, i32) {
    %c0_i32 = arith.constant 0 : i32
    %c0_i32_0 = arith.constant 0 : i32
    return %arg0, %arg1, %c0_i32 : i32, i32, i32
  }
}

module attributes {stable_mosaic.version = 11 : i64} {
  func.func @kernel(%arg0: i32, %arg1: i32, %arg2: memref<1x8x32xf32, #tpu.memory_space<vmem>>, %arg3: memref<1x8x32xf32, #tpu.memory_space<vmem>>, %arg4: memref<1x8x32xf32, #tpu.memory_space<vmem>>, %arg5: memref<1x8x8xi8, #tpu.memory_space<vmem>>, %arg6: memref<1x8x32xf32, #tpu.memory_space<vmem>>, %arg7: memref<1x8x8xf32, #tpu.memory_space<vmem>>) attributes {dimension_semantics = [#tpu.dimension_semantics<parallel>, #tpu.dimension_semantics<parallel>], iteration_bounds = array<i64: 2, 1>, scalar_prefetch = 0 : i64, scratch_operands = 0 : i64, tpu.core_type = #tpu.core_type<tc>, window_params = [{transform_indices = @transform_0, window_bounds = array<i64: 1, 8, 32>}, {transform_indices = @transform_1, window_bounds = array<i64: 1, 8, 32>}, {transform_indices = @transform_2, window_bounds = array<i64: 1, 8, 32>}, {transform_indices = @transform_3, window_bounds = array<i64: 1, 8, 8>}, {transform_indices = @transform_4, window_bounds = array<i64: 1, 8, 32>}, {transform_indices = @transform_5, window_bounds = array<i64: 1, 8, 8>}]} {
    %c0 = arith.constant 0 : index
    %c0_0 = arith.constant 0 : index
    %c0_1 = arith.constant 0 : index
    %0 = vector.load %arg2[%c0, %c0_0, %c0_1] : memref<1x8x32xf32, #tpu.memory_space<vmem>>, vector<1x8x32xf32>
    %1 = vector.shape_cast %0 : vector<1x8x32xf32> to vector<8x32xf32>
    %cst = arith.constant 9.765625E-4 : f32
    %2 = vector.broadcast %cst : f32 to vector<8x32xf32>
    %3 = arith.mulf %1, %2 : vector<8x32xf32>
    %4 = arith.truncf %3 : vector<8x32xf32> to vector<8x32xbf16>
    %c0_2 = arith.constant 0 : index
    %c0_3 = arith.constant 0 : index
    %c0_4 = arith.constant 0 : index
    %5 = vector.load %arg3[%c0_2, %c0_3, %c0_4] : memref<1x8x32xf32, #tpu.memory_space<vmem>>, vector<1x8x32xf32>
    %6 = vector.shape_cast %5 : vector<1x8x32xf32> to vector<8x32xf32>
    %7 = arith.truncf %6 : vector<8x32xf32> to vector<8x32xbf16>
    %cst_5 = arith.constant dense<0.000000e+00> : vector<8x8xf32>
    %8 = tpu.matmul %4, %7, %cst_5 {dimension_numbers = #tpu.dot_dimension_numbers<[1], [1], [0], [0], [0, 0, 1, 0], [], []>} : vector<8x32xbf16>, vector<8x32xbf16>, vector<8x8xf32> -> vector<8x8xf32>
    %c0_6 = arith.constant 0 : index
    %c0_7 = arith.constant 0 : index
    %c0_8 = arith.constant 0 : index
    %9 = vector.load %arg5[%c0_6, %c0_7, %c0_8] : memref<1x8x8xi8, #tpu.memory_space<vmem>>, vector<1x8x8xi8>
    %10 = vector.shape_cast %9 : vector<1x8x8xi8> to vector<8x8xi8>
    %c0_i8 = arith.constant 0 : i8
    %11 = vector.broadcast %c0_i8 : i8 to vector<8x8xi8>
    %12 = arith.cmpi ne, %10, %11 : vector<8x8xi8>
    %cst_9 = arith.constant -1.000000e+09 : f32
    %13 = vector.broadcast %cst_9 : f32 to vector<8x8xf32>
    %14 = arith.select %12, %13, %8 : vector<8x8xi1>, vector<8x8xf32>
    %cst_10 = arith.constant dense<0xFF800000> : vector<8xf32>
    %15 = vector.multi_reduction <maximumf>, %14, %cst_10 [1] : vector<8x8xf32> to vector<8xf32>
    %16 = vector.shape_cast %15 : vector<8xf32> to vector<8x1xf32>
    %17 = vector.broadcast %16 : vector<8x1xf32> to vector<8x8xf32>
    %18 = arith.subf %14, %17 : vector<8x8xf32>
    %19 = math.exp %18 : vector<8x8xf32>
    %cst_11 = arith.constant dense<0.000000e+00> : vector<8xf32>
    %20 = vector.multi_reduction <add>, %19, %cst_11 [1] : vector<8x8xf32> to vector<8xf32>
    %21 = vector.shape_cast %20 : vector<8xf32> to vector<8x1xf32>
    %22 = tpu.reciprocal %21 : vector<8x1xf32> -> vector<8x1xf32>
    %23 = vector.broadcast %22 : vector<8x1xf32> to vector<8x8xf32>
    %24 = arith.mulf %19, %23 : vector<8x8xf32>
    %25 = arith.truncf %24 : vector<8x8xf32> to vector<8x8xbf16>
    %c0_12 = arith.constant 0 : index
    %c0_13 = arith.constant 0 : index
    %c0_14 = arith.constant 0 : index
    %26 = vector.load %arg4[%c0_12, %c0_13, %c0_14] : memref<1x8x32xf32, #tpu.memory_space<vmem>>, vector<1x8x32xf32>
    %27 = vector.shape_cast %26 : vector<1x8x32xf32> to vector<8x32xf32>
    %28 = arith.truncf %27 : vector<8x32xf32> to vector<8x32xbf16>
    %cst_15 = arith.constant dense<0.000000e+00> : vector<8x32xf32>
    %29 = tpu.matmul %25, %28, %cst_15 {dimension_numbers = #tpu.dot_dimension_numbers<[1], [0], [0], [1], [0, 0, 1, 1], [], []>} : vector<8x8xbf16>, vector<8x32xbf16>, vector<8x32xf32> -> vector<8x32xf32>
    %c0_16 = arith.constant 0 : index
    %c0_17 = arith.constant 0 : index
    %c0_18 = arith.constant 0 : index
    %30 = vector.load %arg6[%c0_16, %c0_17, %c0_18] : memref<1x8x32xf32, #tpu.memory_space<vmem>>, vector<1x8x32xf32>
    %31 = vector.shape_cast %30 : vector<1x8x32xf32> to vector<8x32xf32>
    %32 = vector.shape_cast %29 : vector<8x32xf32> to vector<1x8x32xf32>
    tpu.vector_store %arg6[%c0_16, %c0_17, %c0_18], %32 {strides = array<i32>} : memref<1x8x32xf32, #tpu.memory_space<vmem>>, vector<1x8x32xf32>,
    %c0_19 = arith.constant 0 : index
    %c0_20 = arith.constant 0 : index
    %c0_21 = arith.constant 0 : index
    %33 = vector.load %arg7[%c0_19, %c0_20, %c0_21] : memref<1x8x8xf32, #tpu.memory_space<vmem>>, vector<1x8x8xf32>
    %34 = vector.shape_cast %33 : vector<1x8x8xf32> to vector<8x8xf32>
    %35 = vector.shape_cast %24 : vector<8x8xf32> to vector<1x8x8xf32>
    tpu.vector_store %arg7[%c0_19, %c0_20, %c0_21], %35 {strides = array<i32>} : memref<1x8x8xf32, #tpu.memory_space<vmem>>, vector<1x8x8xf32>,
    return
  }
  func.func @transform_0(%arg0: i32, %arg1: i32) -> (i32, i32, i32) {
    %c0_i32 = arith.constant 0 : i32
    %c0_i32_0 = arith.constant 0 : i32
    return %arg0, %arg1, %c0_i32 : i32, i32, i32
  }
  func.func @transform_1(%arg0: i32, %arg1: i32) -> (i32, i32, i32) {
    %c0_i32 = arith.constant 0 : i32
    %c0_i32_0 = arith.constant 0 : i32
    %c0_i32_1 = arith.constant 0 : i32
    return %arg0, %c0_i32, %c0_i32_0 : i32, i32, i32
  }
  func.func @transform_2(%arg0: i32, %arg1: i32) -> (i32, i32, i32) {
    %c0_i32 = arith.constant 0 : i32
    %c0_i32_0 = arith.constant 0 : i32
    %c0_i32_1 = arith.constant 0 : i32
    return %arg0, %c0_i32, %c0_i32_0 : i32, i32, i32
  }
  func.func @transform_3(%arg0: i32, %arg1: i32) -> (i32, i32, i32) {
    %c0_i32 = arith.constant 0 : i32
    %c0_i32_0 = arith.constant 0 : i32
    return %arg0, %arg1, %c0_i32 : i32, i32, i32
  }
  func.func @transform_4(%arg0: i32, %arg1: i32) -> (i32, i32, i32) {
    %c0_i32 = arith.constant 0 : i32
    %c0_i32_0 = arith.constant 0 : i32
    return %arg0, %arg1, %c0_i32 : i32, i32, i32
  }
  func.func @transform_5(%arg0: i32, %arg1: i32) -> (i32, i32, i32) {
    %c0_i32 = arith.constant 0 : i32
    %c0_i32_0 = arith.constant 0 : i32
    return %arg0, %arg1, %c0_i32 : i32, i32, i32
  }
}

</mosaic_0001>

<llo_original>
// kernel: tpu_custom_call.1
$region0: #{tpu_custom_call.1}
  #allocation0 [shape = 'u32[]', space=smem, size = 0x4, offset = 0x4, fixed_abs, tag = 'smem constant byte address 0x4 - core index']
  #allocation1 [shape = 'u32[144,128]{1,0:T(1,128)}', space=vmem, size = 0x12000, scoped, tag = 'internal scratch']
  %s0 = inlined_call_operand.hbm [shape: f32[2,8,32], index: 0, kind: input, shape index: {}]
  %s1 = inlined_call_operand.hbm [shape: f32[2,8,32], index: 1, kind: input, shape index: {}]
  %s2 = inlined_call_operand.hbm [shape: f32[2,8,32], index: 2, kind: input, shape index: {}]
  %s3 = inlined_call_operand.vmem [shape: s8[2,8,8], index: 3, kind: input, shape index: {}]
  %s4 = inlined_call_operand.hbm [shape: f32[2,8,32], index: 4, kind: output, shape index: {0}]
  %s5 = inlined_call_operand.hbm [shape: f32[2,8,8], index: 5, kind: output, shape index: {1}]
  %6 = xla_tuple %s4, %s5
  %s7 = sld [smem:[#allocation0]]
  $region69: #{tpu_custom_call.1} parent=0
    _
  %s9 = ssub.s32 1, %s7
  %s10 = scalar_select 0, %s9, %s7
  $region1: #{tpu_custom_call.1} parent=0
    #allocation2 [shape = 'u8[8192]{0}', space=vmem, size = 0x2000, scoped, tag = 'input window, operand 0']
    #allocation3 [shape = 's32[2]{0}', space=sflag, size = 0x8, scoped, tag = 'scoped memory for tpu_custom_call.1']
    #allocation4 [shape = 's32[2]{0}', space=sflag, size = 0x8, scoped, tag = 'scoped memory for tpu_custom_call.1']
    #allocation5 [shape = 'u8[4096]{0}', space=vmem, size = 0x1000, scoped, tag = 'input window, operand 1, single buffered']
    #allocation6 [shape = 's32[1]{0}', space=sflag, size = 0x4, scoped, tag = 'scoped memory for tpu_custom_call.1']
    #allocation7 [shape = 'u8[4096]{0}', space=vmem, size = 0x1000, scoped, tag = 'input window, operand 2, single buffered']
    #allocation8 [shape = 'u8[8192]{0}', space=vmem, size = 0x2000, scoped, tag = 'output window, operand 0']
    #allocation9 [shape = 'u8[8192]{0}', space=vmem, size = 0x2000, scoped, tag = 'output window, operand 1']
    #allocation10 [shape = 's32[2]{0}', space=sflag, size = 0x8, scoped, tag = 'scoped memory for tpu_custom_call.1']
    %11 = vsyncpa [#allocation3], 0
    %s12 = scalar_lea.sflag [#allocation3], 1
    %13 = vsyncpa %s12, 0
    %14 = vsyncpa [#allocation6], 0
    %15 = vsyncpa [#allocation4], 0
    %s16 = scalar_lea.sflag [#allocation4], 1
    %17 = vsyncpa %s16, 0
    %18 = vsyncpa [#allocation10], 0
    %s19 = scalar_lea.sflag [#allocation10], 1
    %20 = vsyncpa %s19, 0
    loop: start=0, step=1, limit=4
    $region2: #{tpu_custom_call.1} parent=1 // loop_pre_header
      _
    $region3: #{tpu_custom_call.1} parent=1 // loop_header
      %s22 = sphi 0, %s26
      %p23 = scmp.ge.s32.totalorder %s22, 4
      %s29 = sphi 0, %s41
      %s30 = sphi 0, %s37
      %s31 = sphi 0, %s29
      %s32 = sphi 0, %s30
      %s33 = sphi 0, %s31
      %s34 = sphi 0, %s32
      %s46 = sphi 0, %s48
      %s49 = sphi 0, %s46
      %s50 = sphi 0, %s49
      %s66 = sphi 0, %s50
      %s72 = sphi 0, %s74
      %s75 = sphi 0, %s72
      %s76 = sphi 0, %s75
      %s92 = sphi 0, %s76
      %s98 = sphi 0, %s100
      %s101 = sphi 0, %s98
      %s102 = sphi 0, %s101
      %s118 = sphi 0, %s102
      %s126 = sphi 0, %s128
      %s129 = sphi 0, %s126
      %s130 = sphi 0, %s129
      %s146 = sphi 0, %s130
      %s154 = sphi 0, %s156
      %s157 = sphi 0, %s154
      %s158 = sphi 0, %s157
      %s174 = sphi 0, %s158
      %s182 = sphi 0, %s184
      %s185 = sphi 0, %s182
      %s186 = sphi 0, %s185
      %s202 = sphi 0, %s186
    $region4: #{tpu_custom_call.1} parent=1 // loop_header_branch
      %25 = sbr.rel (%p23) target = $region8
    $region5: #{tpu_custom_call.1} parent=1 // loop_body
      %s27 = ssub.s32 %s22, 1
      %s28 = ssub.s32 %s22, 2
      %s35 = sadd.s32 1, %s30
      %p36 = scmp.ge.s32.totalorder %s35, 1
      %s37 = scalar_select %p36, 0, %s35
      %s38 = sadd.s32 1, %s29
      %s39 = scalar_select %p36, %s38, %s29
      %p40 = scmp.ge.s32.totalorder %s39, 2
      %s41 = scalar_select %p40, 0, %s39
      %s42 = ssub.s32 %s29, %s41
      %s43 = ssub.s32 %s30, %s37
      %s44 = sor.u32 %s42, %s43
      %p45 = scmp.eq.s32.totalorder %s44, 0
      %s47 = sadd.s32 %s46, 1
      %s48 = scalar_select %p45, %s46, %s47
      %p51 = pneg %p45
      %p52 = scmp.eq.s32.totalorder %s22, 1
      %p53 = por %p51, %p52
      %p54 = scmp.ne.s32.totalorder %s46, %s49
      %p55 = scmp.eq.s32.totalorder %s22, 0
      %p56 = por %p54, %p55
      %p57 = scmp.ne.s32.totalorder %s46, %s49
      %p58 = scmp.eq.s32.totalorder %s27, 1
      %p59 = por %p57, %p58
      %p60 = scmp.ne.s32.totalorder %s49, %s50
      %p61 = scmp.eq.s32.totalorder %s27, 0
      %p62 = por %p60, %p61
      %p63 = scmp.ne.s32.totalorder %s49, %s50
      %p64 = scmp.eq.s32.totalorder %s28, 1
      %p65 = por %p63, %p64
      %p67 = scmp.ne.s32.totalorder %s50, %s66
      %p68 = scmp.eq.s32.totalorder %s28, 0
      %p69 = por %p67, %p68
      %s70 = ssub.s32 %s29, %s41
      %p71 = scmp.eq.s32.totalorder %s70, 0
      %s73 = sadd.s32 %s72, 1
      %s74 = scalar_select %p71, %s72, %s73
      %p77 = pneg %p71
      %p78 = scmp.eq.s32.totalorder %s22, 1
      %p79 = por %p77, %p78
      %p80 = scmp.ne.s32.totalorder %s72, %s75
      %p81 = scmp.eq.s32.totalorder %s22, 0
      %p82 = por %p80, %p81
      %p83 = scmp.ne.s32.totalorder %s72, %s75
      %p84 = scmp.eq.s32.totalorder %s27, 1
      %p85 = por %p83, %p84
      %p86 = scmp.ne.s32.totalorder %s75, %s76
      %p87 = scmp.eq.s32.totalorder %s27, 0
      %p88 = por %p86, %p87
      %p89 = scmp.ne.s32.totalorder %s75, %s76
      %p90 = scmp.eq.s32.totalorder %s28, 1
      %p91 = por %p89, %p90
      %p93 = scmp.ne.s32.totalorder %s76, %s92
      %p94 = scmp.eq.s32.totalorder %s28, 0
      %p95 = por %p93, %p94
      %s96 = ssub.s32 %s29, %s41
      %p97 = scmp.eq.s32.totalorder %s96, 0
      %s99 = sadd.s32 %s98, 1
      %s100 = scalar_select %p97, %s98, %s99
      %p103 = pneg %p97
      %p104 = scmp.eq.s32.totalorder %s22, 1
      %p105 = por %p103, %p104
      %p106 = scmp.ne.s32.totalorder %s98, %s101
      %p107 = scmp.eq.s32.totalorder %s22, 0
      %p108 = por %p106, %p107
      %p109 = scmp.ne.s32.totalorder %s98, %s101
      %p110 = scmp.eq.s32.totalorder %s27, 1
      %p111 = por %p109, %p110
      %p112 = scmp.ne.s32.totalorder %s101, %s102
      %p113 = scmp.eq.s32.totalorder %s27, 0
      %p114 = por %p112, %p113
      %p115 = scmp.ne.s32.totalorder %s101, %s102
      %p116 = scmp.eq.s32.totalorder %s28, 1
      %p117 = por %p115, %p116
      %p119 = scmp.ne.s32.totalorder %s102, %s118
      %p120 = scmp.eq.s32.totalorder %s28, 0
      %p121 = por %p119, %p120
      %s122 = ssub.s32 %s29, %s41
      %s123 = ssub.s32 %s30, %s37
      %s124 = sor.u32 %s122, %s123
      %p125 = scmp.eq.s32.totalorder %s124, 0
      %s127 = sadd.s32 %s126, 1
      %s128 = scalar_select %p125, %s126, %s127
      %p131 = pneg %p125
      %p132 = scmp.eq.s32.totalorder %s22, 1
      %p133 = por %p131, %p132
      %p134 = scmp.ne.s32.totalorder %s126, %s129
      %p135 = scmp.eq.s32.totalorder %s22, 0
      %p136 = por %p134, %p135
      %p137 = scmp.ne.s32.totalorder %s126, %s129
      %p138 = scmp.eq.s32.totalorder %s27, 1
      %p139 = por %p137, %p138
      %p140 = scmp.ne.s32.totalorder %s129, %s130
      %p141 = scmp.eq.s32.totalorder %s27, 0
      %p142 = por %p140, %p141
      %p143 = scmp.ne.s32.totalorder %s129, %s130
      %p144 = scmp.eq.s32.totalorder %s28, 1
      %p145 = por %p143, %p144
      %p147 = scmp.ne.s32.totalorder %s130, %s146
      %p148 = scmp.eq.s32.totalorder %s28, 0
      %p149 = por %p147, %p148
      %s150 = ssub.s32 %s29, %s41
      %s151 = ssub.s32 %s30, %s37
      %s152 = sor.u32 %s150, %s151
      %p153 = scmp.eq.s32.totalorder %s152, 0
      %s155 = sadd.s32 %s154, 1
      %s156 = scalar_select %p153, %s154, %s155
      %p159 = pneg %p153
      %p160 = scmp.eq.s32.totalorder %s22, 1
      %p161 = por %p159, %p160
      %p162 = scmp.ne.s32.totalorder %s154, %s157
      %p163 = scmp.eq.s32.totalorder %s22, 0
      %p164 = por %p162, %p163
      %p165 = scmp.ne.s32.totalorder %s154, %s157
      %p166 = scmp.eq.s32.totalorder %s27, 1
      %p167 = por %p165, %p166
      %p168 = scmp.ne.s32.totalorder %s157, %s158
      %p169 = scmp.eq.s32.totalorder %s27, 0
      %p170 = por %p168, %p169
      %p171 = scmp.ne.s32.totalorder %s157, %s158
      %p172 = scmp.eq.s32.totalorder %s28, 1
      %p173 = por %p171, %p172
      %p175 = scmp.ne.s32.totalorder %s158, %s174
      %p176 = scmp.eq.s32.totalorder %s28, 0
      %p177 = por %p175, %p176
      %s178 = ssub.s32 %s29, %s41
      %s179 = ssub.s32 %s30, %s37
      %s180 = sor.u32 %s178, %s179
      %p181 = scmp.eq.s32.totalorder %s180, 0
      %s183 = sadd.s32 %s182, 1
      %s184 = scalar_select %p181, %s182, %s183
      %p187 = pneg %p181
      %p188 = scmp.eq.s32.totalorder %s22, 1
      %p189 = por %p187, %p188
      %p190 = scmp.ne.s32.totalorder %s182, %s185
      %p191 = scmp.eq.s32.totalorder %s22, 0
      %p192 = por %p190, %p191
      %p193 = scmp.ne.s32.totalorder %s182, %s185
      %p194 = scmp.eq.s32.totalorder %s27, 1
      %p195 = por %p193, %p194
      %p196 = scmp.ne.s32.totalorder %s185, %s186
      %p197 = scmp.eq.s32.totalorder %s27, 0
      %p198 = por %p196, %p197
      %p199 = scmp.ne.s32.totalorder %s185, %s186
      %p200 = scmp.eq.s32.totalorder %s28, 1
      %p201 = por %p199, %p200
      %p203 = scmp.ne.s32.totalorder %s186, %s202
      %p204 = scmp.eq.s32.totalorder %s28, 0
      %p205 = por %p203, %p204
      %p206 = scmp.le.s32.totalorder 1, %s22
      %p207 = scmp.lt.s32.totalorder %s22, 3
      %p208 = pnand %p206, %p207
      %p209 = pneg %p208
      // Predicated region
      $region9: #{tpu_custom_call.1} parent=5 // pred_check
        _
      $region10: #{tpu_custom_call.1} parent=5 // pred_check_branch
        %211 = sbr.rel (%p208) target = $region12
      $region11: #{tpu_custom_call.1} parent=5 // pred_region
        %s212 = ssub.s32 %s22, 1
        // Predicated region
        $region13: #{tpu_custom_call.1} parent=11 // pred_check
          %p213 = pneg %p88
        $region14: #{tpu_custom_call.1} parent=11 // pred_check_branch
          %215 = sbr.rel (%p213) target = $region16
        $region15: #{tpu_custom_call.1} parent=11 // pred_region
          %s217 = ssub.s32 128, 128
          %218 = vsyncadd [#allocation6], %s217
          %s219 = smul.addr %s31, 128
          %s220 = scalar_lea.hbm %s1, %s219
          %s222 = sshll.u32 [#allocation5], 4
          %s223 = int_to_ptr.vmem [resolvable:$true] %s222
          %225 = dma.hbm_to_vmem [thread:$0]  %s220, 128, %s223, [#allocation6]
        $region16: #{tpu_custom_call.1} parent=11 // pred_fallthru
          _
        // Predicated region
        $region17: #{tpu_custom_call.1} parent=11 // pred_check
          %p226 = pneg %p114
        $region18: #{tpu_custom_call.1} parent=11 // pred_check_branch
          %228 = sbr.rel (%p226) target = $region20
        $region19: #{tpu_custom_call.1} parent=11 // pred_region
          %s230 = ssub.s32 128, 128
          %231 = vsyncadd [#allocation6], %s230
          %s232 = smul.addr %s31, 128
          %s233 = scalar_lea.hbm %s2, %s232
          %s235 = sshll.u32 [#allocation7], 4
          %s236 = int_to_ptr.vmem [resolvable:$true] %s235
          %238 = dma.hbm_to_vmem [thread:$0]  %s233, 128, %s236, [#allocation6]
        $region20: #{tpu_custom_call.1} parent=11 // pred_fallthru
          _
      $region12: #{tpu_custom_call.1} parent=5 // pred_fallthru
        _
      %p239 = scmp.lt.s32.totalorder %s22, 2
      // Predicated region
      $region21: #{tpu_custom_call.1} parent=5 // pred_check
        %p240 = pneg %p239
      $region22: #{tpu_custom_call.1} parent=5 // pred_check_branch
        %242 = sbr.rel (%p240) target = $region24
      $region23: #{tpu_custom_call.1} parent=5 // pred_region
        // Predicated region
        $region25: #{tpu_custom_call.1} parent=23 // pred_check
          %p243 = pneg %p56
        $region26: #{tpu_custom_call.1} parent=23 // pred_check_branch
          %245 = sbr.rel (%p243) target = $region28
        $region27: #{tpu_custom_call.1} parent=23 // pred_region
          %s246 = sand.u32 %s46, 1
          %s247 = scalar_lea.sflag [#allocation3], %s246
          %s248 = sand.u32 %s46, 1
          %s249 = smul.addr %s248, 8
          %s250 = scalar_lea.vmem [#allocation2], %s249
          %s252 = ssub.s32 128, 128
          %253 = vsyncadd %s247, %s252
          %s254 = sadd.s32 %s30, %s29
          %s255 = smul.addr %s254, 128
          %s256 = scalar_lea.hbm %s0, %s255
          %s258 = sshll.u32 %s250, 4
          %s259 = int_to_ptr.vmem [resolvable:$true] %s258
          %261 = dma.hbm_to_vmem [thread:$0]  %s256, 128, %s259, %s247
        $region28: #{tpu_custom_call.1} parent=23 // pred_fallthru
          _
        // Predicated region
        $region29: #{tpu_custom_call.1} parent=23 // pred_check
          %p262 = pneg %p136
        $region30: #{tpu_custom_call.1} parent=23 // pred_check_branch
          %264 = sbr.rel (%p262) target = $region32
        $region31: #{tpu_custom_call.1} parent=23 // pred_region
          %p265 = scmp.lt.s32.totalorder %s29, 1
          %s266 = scalar_select %p265, %s29, 1
          %p267 = scmp.lt.s32.totalorder %s30, 0
          %s268 = scalar_select %p267, %s30, 0
          %s269 = sadd.s32 %s268, %s266
          %s270 = smul.addr %s269, 2
          %s271 = scalar_lea.vmem %s3, %s270
        $region32: #{tpu_custom_call.1} parent=23 // pred_fallthru
          _
      $region24: #{tpu_custom_call.1} parent=5 // pred_fallthru
        _
      %p272 = scmp.le.s32.totalorder 1, %s22
      %p273 = scmp.lt.s32.totalorder %s22, 3
      %p274 = pnand %p272, %p273
      %p275 = pneg %p274
      // Predicated region
      $region33: #{tpu_custom_call.1} parent=5 // pred_check
        _
      $region34: #{tpu_custom_call.1} parent=5 // pred_check_branch
        %277 = sbr.rel (%p274) target = $region36
      $region35: #{tpu_custom_call.1} parent=5 // pred_region
        %s278 = ssub.s32 %s22, 1
        %s279 = sand.u32 %s49, 1
        %s280 = scalar_lea.sflag [#allocation3], %s279
        %s281 = sand.u32 %s49, 1
        %s282 = smul.addr %s281, 8
        %s283 = scalar_lea.vmem [#allocation2], %s282
        // Predicated region
        $region37: #{tpu_custom_call.1} parent=35 // pred_check
          %p284 = pneg %p62
        $region38: #{tpu_custom_call.1} parent=35 // pred_check_branch
          %286 = sbr.rel (%p284) target = $region40
        $region39: #{tpu_custom_call.1} parent=35 // pred_region
          %287 = dma.done %s280, 128
        $region40: #{tpu_custom_call.1} parent=35 // pred_fallthru
          _
        // Predicated region
        $region41: #{tpu_custom_call.1} parent=35 // pred_check
          %p288 = pneg %p88
        $region42: #{tpu_custom_call.1} parent=35 // pred_check_branch
          %290 = sbr.rel (%p288) target = $region44
        $region43: #{tpu_custom_call.1} parent=35 // pred_region
          %291 = dma.done [#allocation6], 128
        $region44: #{tpu_custom_call.1} parent=35 // pred_fallthru
          _
        // Predicated region
        $region45: #{tpu_custom_call.1} parent=35 // pred_check
          %p292 = pneg %p114
        $region46: #{tpu_custom_call.1} parent=35 // pred_check_branch
          %294 = sbr.rel (%p292) target = $region48
        $region47: #{tpu_custom_call.1} parent=35 // pred_region
          %295 = dma.done [#allocation6], 128
        $region48: #{tpu_custom_call.1} parent=35 // pred_fallthru
          _
        %s296 = sand.u32 %s49, 1
        %s297 = scalar_lea.sflag [#allocation3], %s296
        %s298 = sand.u32 %s49, 1
        %s299 = smul.addr %s298, 8
        %s300 = scalar_lea.vmem [#allocation2], %s299
        %p301 = pneg %p62
        %p302 = pneg %p59
        %p303 = pneg %p88
        %p304 = pneg %p85
        %p305 = pneg %p114
        %p306 = pneg %p111
        %p307 = scmp.lt.s32.totalorder %s31, 1
        %s308 = scalar_select %p307, %s31, 1
        %p309 = scmp.lt.s32.totalorder %s32, 0
        %s310 = scalar_select %p309, %s32, 0
        %s311 = sadd.s32 %s310, %s308
        %s312 = smul.addr %s311, 2
        %s313 = scalar_lea.vmem %s3, %s312
        %p314 = pneg %p142
        %p315 = pneg %p139
        %p316 = pneg %p170
        %p317 = pneg %p167
        %s318 = sand.u32 %s157, 1
        %s319 = scalar_lea.sflag [#allocation4], %s318
        %s320 = sand.u32 %s157, 1
        %s321 = smul.addr %s320, 8
        %s322 = scalar_lea.vmem [#allocation8], %s321
        %p323 = pneg %p198
        %p324 = pneg %p195
        %s325 = sand.u32 %s185, 1
        %s326 = scalar_lea.sflag [#allocation10], %s325
        %s327 = sand.u32 %s185, 1
        %s328 = smul.addr %s327, 8
        %s329 = scalar_lea.vmem [#allocation9], %s328
        %p330 = scmp.lt.s32.totalorder %s31, 1
        %s331 = scalar_select %p330, %s31, 1
        %p332 = scmp.lt.s32.totalorder %s32, 0
        %s333 = scalar_select %p332, %s32, 0
        %s334 = sadd.s32 %s333, %s331
        %s335 = smul.addr %s334, 2
        %s336 = scalar_lea.vmem %s3, %s335
        %v340 = vld [vmem:[%s283] sm:$0xff]
        %v341 = vmul.f32 %v340, 0.0009765625
        %v342 = vpack.c.bf16 %v341, %v341
        %v343 = vld [vmem:[#allocation5] sm:$0xff]
        %v344 = vpack.c.bf16 %v343, %v343
        %vm345 = vcmask 261120
        %v347 = vsel %vm345, %v342, 0
        %v350 = vsel %vm345, %v344, 0
        %352 = vmatprep.subr.bf16.mxu0 0
        %353 = vmatpush1.bf16.xpose.msra.mxu0 %v350
        %354 = vmatprep.subr.bf16.mxu0 0
        %355 = vmatpush1.bf16.xpose.msra.mxu0 0
        %356 = vmatprep.subr.bf16.mxu0 0
        %357 = vmatpush1.bf16.xpose.msra.mxu0 0
        %358 = vmatprep.subr.bf16.mxu0 0
        %359 = vmatpush1.bf16.xpose.msra.mxu0 0
        %360 = vmatprep.subr.bf16.mxu0 0
        %361 = vmatpush1.bf16.xpose.msra.mxu0 0
        %362 = vmatprep.subr.bf16.mxu0 0
        %363 = vmatpush1.bf16.xpose.msra.mxu0 0
        %364 = vmatprep.subr.bf16.mxu0 0
        %365 = vmatpush1.bf16.xpose.msra.mxu0 0
        %366 = vmatprep.subr.bf16.mxu0 0
        %367 = vmatpush1.bf16.xpose.msra.mxu0 0
        %368 = vmatprep.subr.bf16.mxu0 0
        %369 = vmatpush1.bf16.xpose.msra.mxu0 0
        %370 = vmatprep.subr.bf16.mxu0 0
        %371 = vmatpush1.bf16.xpose.msra.mxu0 0
        %372 = vmatprep.subr.bf16.mxu0 0
        %373 = vmatpush1.bf16.xpose.msra.mxu0 0
        %374 = vmatprep.subr.bf16.mxu0 0
        %375 = vmatpush1.bf16.xpose.msra.mxu0 0
        %376 = vmatprep.subr.bf16.mxu0 0
        %377 = vmatpush1.bf16.xpose.msra.mxu0 0
        %378 = vmatprep.subr.bf16.mxu0 0
        %379 = vmatpush1.bf16.xpose.msra.mxu0 0
        %380 = vmatprep.subr.bf16.mxu0 0
        %381 = vmatpush1.bf16.xpose.msra.mxu0 0
        %382 = vmatprep.subr.bf16.mxu0 0
        %383 = vmatpush1.bf16.xpose.msra.mxu0 0
        %384 = vmatprep.mubr.bf16.mxu0 0
        %385 = vmatmul.mubr.bf16.gmra.mrb[0].mxu0 %v347
        %v386 = vpop.f32.mrb[0].mxu0
        %v387 = vadd.f32 0.0, %v386
        %v388 = vpop.f32.mrb[0].mxu0
        %v389 = vpop.f32.mrb[0].mxu0
        %v390 = vpop.f32.mrb[0].mxu0
        %391 = vdwg.mxu0
        %v392 = vld [vmem:[%s336] sm:$0x3]
        %vm393 = vnez %v392
        %v394 = vsel %vm393, 16843009, 0
        %v395 = vunpack.c.0.s8 %v394
        %vm396 = vcmp.ne.s32.totalorder %v395, 0
        %v397 = vsel %vm396, -1e+09, %v387
        %vm398 = vcmask 64512
        %v399 = vsel %vm398, %v397, -inf
        %400 = vmax.xlane.f32.xlu0 %v399
        %v401 = vpop.xlane.xlu0 %400
        %v402 = vsub.f32 %v397, %v401
        %v403 = vmul.f32 %v402, 1.442695
        %v404 = vpow.pop %v403
        %v405 = vsel %vm398, %v404, 0.0
        %406 = vadd.xlane.f32.xlu0 %v405
        %v407 = vpop.xlane.xlu0 %406
        %v408 = vrcp.pop %v407
        %v409 = vmul.f32 %v404, %v408
        %v410 = vpack.c.bf16 %v409, %v409
        %v411 = vld [vmem:[#allocation7] sm:$0xff]
        %v412 = vpack.c.bf16 %v411, %v411
        %v414 = vsel %vm398, %v410, 0
        %vm416 = vcmask 1043456
        %v418 = vsel %vm416, %v412, 0
        %420 = vmatprep.subr.bf16.mxu0 0
        %421 = vmatpush1.bf16.msra.mxu0 %v418
        %422 = vmatprep.subr.bf16.mxu0 0
        %423 = vmatpush1.bf16.msra.mxu0 0
        %424 = vmatprep.subr.bf16.mxu0 0
        %425 = vmatpush1.bf16.msra.mxu0 0
        %426 = vmatprep.subr.bf16.mxu0 0
        %427 = vmatpush1.bf16.msra.mxu0 0
        %428 = vmatprep.subr.bf16.mxu0 0
        %429 = vmatpush1.bf16.msra.mxu0 0
        %430 = vmatprep.subr.bf16.mxu0 0
        %431 = vmatpush1.bf16.msra.mxu0 0
        %432 = vmatprep.subr.bf16.mxu0 0
        %433 = vmatpush1.bf16.msra.mxu0 0
        %434 = vmatprep.subr.bf16.mxu0 0
        %435 = vmatpush1.bf16.msra.mxu0 0
        %436 = vmatprep.subr.bf16.mxu0 0
        %437 = vmatpush1.bf16.msra.mxu0 0
        %438 = vmatprep.subr.bf16.mxu0 0
        %439 = vmatpush1.bf16.msra.mxu0 0
        %440 = vmatprep.subr.bf16.mxu0 0
        %441 = vmatpush1.bf16.msra.mxu0 0
        %442 = vmatprep.subr.bf16.mxu0 0
        %443 = vmatpush1.bf16.msra.mxu0 0
        %444 = vmatprep.subr.bf16.mxu0 0
        %445 = vmatpush1.bf16.msra.mxu0 0
        %446 = vmatprep.subr.bf16.mxu0 0
        %447 = vmatpush1.bf16.msra.mxu0 0
        %448 = vmatprep.subr.bf16.mxu0 0
        %449 = vmatpush1.bf16.msra.mxu0 0
        %450 = vmatprep.subr.bf16.mxu0 0
        %451 = vmatpush1.bf16.msra.mxu0 0
        %452 = vmatprep.mubr.bf16.mxu0 0
        %453 = vmatmul.mubr.bf16.gmra.mrb[0].mxu0 %v414
        %v454 = vpop.f32.mrb[0].mxu0
        %v455 = vadd.f32 0.0, %v454
        %v456 = vpop.f32.mrb[0].mxu0
        %v457 = vpop.f32.mrb[0].mxu0
        %v458 = vpop.f32.mrb[0].mxu0
        %459 = vdwg.mxu0
        %460 = vst.msk [vmem:[%s322] sm:$0xff] %vm345, %v455
        %461 = vst.msk [vmem:[%s329] sm:$0xff] %vm398, %v409
        %s462 = sand.u32 %s157, 1
        %s463 = scalar_lea.sflag [#allocation4], %s462
        %s464 = sand.u32 %s157, 1
        %s465 = smul.addr %s464, 8
        %s466 = scalar_lea.vmem [#allocation8], %s465
        %s467 = sand.u32 %s185, 1
        %s468 = scalar_lea.sflag [#allocation10], %s467
        %s469 = sand.u32 %s185, 1
        %s470 = smul.addr %s469, 8
        %s471 = scalar_lea.vmem [#allocation9], %s470
        // Predicated region
        $region49: #{tpu_custom_call.1} parent=35 // pred_check
          %p472 = pneg %p167
        $region50: #{tpu_custom_call.1} parent=35 // pred_check_branch
          %474 = sbr.rel (%p472) target = $region52
        $region51: #{tpu_custom_call.1} parent=35 // pred_region
          %s476 = ssub.s32 128, 128
          %477 = vsyncadd %s463, %s476
          %s478 = sadd.s32 %s32, %s31
          %s479 = smul.addr %s478, 128
          %s480 = scalar_lea.hbm %s4, %s479
          %s482 = sshll.u32 %s466, 4
          %s483 = int_to_ptr.vmem [resolvable:$true] %s482
          %485 = dma.vmem_to_hbm [thread:$0]  %s483, 128, %s480, %s463
        $region52: #{tpu_custom_call.1} parent=35 // pred_fallthru
          _
        // Predicated region
        $region53: #{tpu_custom_call.1} parent=35 // pred_check
          %p486 = pneg %p195
        $region54: #{tpu_custom_call.1} parent=35 // pred_check_branch
          %488 = sbr.rel (%p486) target = $region56
        $region55: #{tpu_custom_call.1} parent=35 // pred_region
          %s490 = ssub.s32 128, 128
          %491 = vsyncadd %s468, %s490
          %s492 = sadd.s32 %s32, %s31
          %s493 = smul.addr %s492, 128
          %s494 = scalar_lea.hbm %s5, %s493
          %s496 = sshll.u32 %s471, 4
          %s497 = int_to_ptr.vmem [resolvable:$true] %s496
          %499 = dma.vmem_to_hbm [thread:$0]  %s497, 128, %s494, %s468
        $region56: #{tpu_custom_call.1} parent=35 // pred_fallthru
          _
      $region36: #{tpu_custom_call.1} parent=5 // pred_fallthru
        _
      %p500 = scmp.le.s32.totalorder 2, %s22
      // Predicated region
      $region57: #{tpu_custom_call.1} parent=5 // pred_check
        %p501 = pneg %p500
      $region58: #{tpu_custom_call.1} parent=5 // pred_check_branch
        %503 = sbr.rel (%p501) target = $region60
      $region59: #{tpu_custom_call.1} parent=5 // pred_region
        %s504 = ssub.s32 %s22, 2
        // Predicated region
        $region61: #{tpu_custom_call.1} parent=59 // pred_check
          %p505 = pneg %p173
        $region62: #{tpu_custom_call.1} parent=59 // pred_check_branch
          %507 = sbr.rel (%p505) target = $region64
        $region63: #{tpu_custom_call.1} parent=59 // pred_region
          %s508 = sand.u32 %s158, 1
          %s509 = scalar_lea.sflag [#allocation4], %s508
          %s510 = sand.u32 %s158, 1
          %s511 = smul.addr %s510, 8
          %s512 = scalar_lea.vmem [#allocation8], %s511
          %513 = dma.done %s509, 128
        $region64: #{tpu_custom_call.1} parent=59 // pred_fallthru
          _
        // Predicated region
        $region65: #{tpu_custom_call.1} parent=59 // pred_check
          %p514 = pneg %p201
        $region66: #{tpu_custom_call.1} parent=59 // pred_check_branch
          %516 = sbr.rel (%p514) target = $region68
        $region67: #{tpu_custom_call.1} parent=59 // pred_region
          %s517 = sand.u32 %s186, 1
          %s518 = scalar_lea.sflag [#allocation10], %s517
          %s519 = sand.u32 %s186, 1
          %s520 = smul.addr %s519, 8
          %s521 = scalar_lea.vmem [#allocation9], %s520
          %522 = dma.done %s518, 128
        $region68: #{tpu_custom_call.1} parent=59 // pred_fallthru
          _
      $region60: #{tpu_custom_call.1} parent=5 // pred_fallthru
        _
    $region6: #{tpu_custom_call.1} parent=1 // loop_footer
      %s26 = sadd.s32 1, %s22
    $region7: #{tpu_custom_call.1} parent=1 // loop_footer_branch
      %21 = sbr.rel target = $region3
    $region8: #{tpu_custom_call.1} parent=1 // loop_exit
      _
    %523 = vsyncpa [#allocation3], 1
    %s524 = scalar_lea.sflag [#allocation3], 1
    %525 = vsyncpa %s524, 1
    %526 = vsyncpa [#allocation6], 1
    %527 = vsyncpa [#allocation4], 1
    %s528 = scalar_lea.sflag [#allocation4], 1
    %529 = vsyncpa %s528, 1
    %530 = vsyncpa [#allocation10], 1
    %s531 = scalar_lea.sflag [#allocation10], 1
    %532 = vsyncpa %s531, 1

// kernel: tpu_custom_call.1
$region0: #{tpu_custom_call.1}
  #allocation0 [shape = 'u32[]', space=smem, size = 0x4, offset = 0x4, fixed_abs, tag = 'smem constant byte address 0x4 - core index']
  #allocation1 [shape = 'u32[144,128]{1,0:T(1,128)}', space=vmem, size = 0x12000, scoped, tag = 'internal scratch']
  %s0 = inlined_call_operand.hbm [shape: f32[2,8,32], index: 0, kind: input, shape index: {}]
  %s1 = inlined_call_operand.hbm [shape: f32[2,8,32], index: 1, kind: input, shape index: {}]
  %s2 = inlined_call_operand.hbm [shape: f32[2,8,32], index: 2, kind: input, shape index: {}]
  %s3 = inlined_call_operand.vmem [shape: s8[2,8,8], index: 3, kind: input, shape index: {}]
  %s4 = inlined_call_operand.hbm [shape: f32[2,8,32], index: 4, kind: output, shape index: {0}]
  %s5 = inlined_call_operand.hbm [shape: f32[2,8,8], index: 5, kind: output, shape index: {1}]
  %6 = xla_tuple %s4, %s5
  %s7 = sld [smem:[#allocation0]]
  $region69: #{tpu_custom_call.1} parent=0
    _
  %s9 = ssub.s32 1, %s7
  %s10 = scalar_select 0, %s9, %s7
  $region1: #{tpu_custom_call.1} parent=0
    #allocation2 [shape = 'u8[8192]{0}', space=vmem, size = 0x2000, scoped, tag = 'input window, operand 0']
    #allocation3 [shape = 's32[2]{0}', space=sflag, size = 0x8, scoped, tag = 'scoped memory for tpu_custom_call.1']
    #allocation4 [shape = 's32[2]{0}', space=sflag, size = 0x8, scoped, tag = 'scoped memory for tpu_custom_call.1']
    #allocation5 [shape = 'u8[8192]{0}', space=vmem, size = 0x2000, scoped, tag = 'input window, operand 1']
    #allocation6 [shape = 's32[2]{0}', space=sflag, size = 0x8, scoped, tag = 'scoped memory for tpu_custom_call.1']
    #allocation7 [shape = 'u8[8192]{0}', space=vmem, size = 0x2000, scoped, tag = 'input window, operand 2']
    #allocation8 [shape = 'u8[8192]{0}', space=vmem, size = 0x2000, scoped, tag = 'output window, operand 0']
    #allocation9 [shape = 'u8[8192]{0}', space=vmem, size = 0x2000, scoped, tag = 'output window, operand 1']
    #allocation10 [shape = 's32[2]{0}', space=sflag, size = 0x8, scoped, tag = 'scoped memory for tpu_custom_call.1']
    %11 = vsyncpa [#allocation3], 0
    %s12 = scalar_lea.sflag [#allocation3], 1
    %13 = vsyncpa %s12, 0
    %14 = vsyncpa [#allocation6], 0
    %s15 = scalar_lea.sflag [#allocation6], 1
    %16 = vsyncpa %s15, 0
    %17 = vsyncpa [#allocation4], 0
    %s18 = scalar_lea.sflag [#allocation4], 1
    %19 = vsyncpa %s18, 0
    %20 = vsyncpa [#allocation10], 0
    %s21 = scalar_lea.sflag [#allocation10], 1
    %22 = vsyncpa %s21, 0
    loop: start=0, step=1, limit=4
    $region2: #{tpu_custom_call.1} parent=1 // loop_pre_header
      _
    $region3: #{tpu_custom_call.1} parent=1 // loop_header
      %s24 = sphi 0, %s28
      %p25 = scmp.ge.s32.totalorder %s24, 4
      %s31 = sphi 0, %s43
      %s32 = sphi 0, %s39
      %s33 = sphi 0, %s31
      %s34 = sphi 0, %s32
      %s35 = sphi 0, %s33
      %s36 = sphi 0, %s34
      %s48 = sphi 0, %s50
      %s51 = sphi 0, %s48
      %s52 = sphi 0, %s51
      %s68 = sphi 0, %s52
      %s74 = sphi 0, %s76
      %s77 = sphi 0, %s74
      %s78 = sphi 0, %s77
      %s94 = sphi 0, %s78
      %s100 = sphi 0, %s102
      %s103 = sphi 0, %s100
      %s104 = sphi 0, %s103
      %s120 = sphi 0, %s104
      %s128 = sphi 0, %s130
      %s131 = sphi 0, %s128
      %s132 = sphi 0, %s131
      %s148 = sphi 0, %s132
      %s156 = sphi 0, %s158
      %s159 = sphi 0, %s156
      %s160 = sphi 0, %s159
      %s176 = sphi 0, %s160
      %s184 = sphi 0, %s186
      %s187 = sphi 0, %s184
      %s188 = sphi 0, %s187
      %s204 = sphi 0, %s188
    $region4: #{tpu_custom_call.1} parent=1 // loop_header_branch
      %27 = sbr.rel (%p25) target = $region8
    $region5: #{tpu_custom_call.1} parent=1 // loop_body
      %s29 = ssub.s32 %s24, 1
      %s30 = ssub.s32 %s24, 2
      %s37 = sadd.s32 1, %s32
      %p38 = scmp.ge.s32.totalorder %s37, 1
      %s39 = scalar_select %p38, 0, %s37
      %s40 = sadd.s32 1, %s31
      %s41 = scalar_select %p38, %s40, %s31
      %p42 = scmp.ge.s32.totalorder %s41, 2
      %s43 = scalar_select %p42, 0, %s41
      %s44 = ssub.s32 %s31, %s43
      %s45 = ssub.s32 %s32, %s39
      %s46 = sor.u32 %s44, %s45
      %p47 = scmp.eq.s32.totalorder %s46, 0
      %s49 = sadd.s32 %s48, 1
      %s50 = scalar_select %p47, %s48, %s49
      %p53 = pneg %p47
      %p54 = scmp.eq.s32.totalorder %s24, 1
      %p55 = por %p53, %p54
      %p56 = scmp.ne.s32.totalorder %s48, %s51
      %p57 = scmp.eq.s32.totalorder %s24, 0
      %p58 = por %p56, %p57
      %p59 = scmp.ne.s32.totalorder %s48, %s51
      %p60 = scmp.eq.s32.totalorder %s29, 1
      %p61 = por %p59, %p60
      %p62 = scmp.ne.s32.totalorder %s51, %s52
      %p63 = scmp.eq.s32.totalorder %s29, 0
      %p64 = por %p62, %p63
      %p65 = scmp.ne.s32.totalorder %s51, %s52
      %p66 = scmp.eq.s32.totalorder %s30, 1
      %p67 = por %p65, %p66
      %p69 = scmp.ne.s32.totalorder %s52, %s68
      %p70 = scmp.eq.s32.totalorder %s30, 0
      %p71 = por %p69, %p70
      %s72 = ssub.s32 %s31, %s43
      %p73 = scmp.eq.s32.totalorder %s72, 0
      %s75 = sadd.s32 %s74, 1
      %s76 = scalar_select %p73, %s74, %s75
      %p79 = pneg %p73
      %p80 = scmp.eq.s32.totalorder %s24, 1
      %p81 = por %p79, %p80
      %p82 = scmp.ne.s32.totalorder %s74, %s77
      %p83 = scmp.eq.s32.totalorder %s24, 0
      %p84 = por %p82, %p83
      %p85 = scmp.ne.s32.totalorder %s74, %s77
      %p86 = scmp.eq.s32.totalorder %s29, 1
      %p87 = por %p85, %p86
      %p88 = scmp.ne.s32.totalorder %s77, %s78
      %p89 = scmp.eq.s32.totalorder %s29, 0
      %p90 = por %p88, %p89
      %p91 = scmp.ne.s32.totalorder %s77, %s78
      %p92 = scmp.eq.s32.totalorder %s30, 1
      %p93 = por %p91, %p92
      %p95 = scmp.ne.s32.totalorder %s78, %s94
      %p96 = scmp.eq.s32.totalorder %s30, 0
      %p97 = por %p95, %p96
      %s98 = ssub.s32 %s31, %s43
      %p99 = scmp.eq.s32.totalorder %s98, 0
      %s101 = sadd.s32 %s100, 1
      %s102 = scalar_select %p99, %s100, %s101
      %p105 = pneg %p99
      %p106 = scmp.eq.s32.totalorder %s24, 1
      %p107 = por %p105, %p106
      %p108 = scmp.ne.s32.totalorder %s100, %s103
      %p109 = scmp.eq.s32.totalorder %s24, 0
      %p110 = por %p108, %p109
      %p111 = scmp.ne.s32.totalorder %s100, %s103
      %p112 = scmp.eq.s32.totalorder %s29, 1
      %p113 = por %p111, %p112
      %p114 = scmp.ne.s32.totalorder %s103, %s104
      %p115 = scmp.eq.s32.totalorder %s29, 0
      %p116 = por %p114, %p115
      %p117 = scmp.ne.s32.totalorder %s103, %s104
      %p118 = scmp.eq.s32.totalorder %s30, 1
      %p119 = por %p117, %p118
      %p121 = scmp.ne.s32.totalorder %s104, %s120
      %p122 = scmp.eq.s32.totalorder %s30, 0
      %p123 = por %p121, %p122
      %s124 = ssub.s32 %s31, %s43
      %s125 = ssub.s32 %s32, %s39
      %s126 = sor.u32 %s124, %s125
      %p127 = scmp.eq.s32.totalorder %s126, 0
      %s129 = sadd.s32 %s128, 1
      %s130 = scalar_select %p127, %s128, %s129
      %p133 = pneg %p127
      %p134 = scmp.eq.s32.totalorder %s24, 1
      %p135 = por %p133, %p134
      %p136 = scmp.ne.s32.totalorder %s128, %s131
      %p137 = scmp.eq.s32.totalorder %s24, 0
      %p138 = por %p136, %p137
      %p139 = scmp.ne.s32.totalorder %s128, %s131
      %p140 = scmp.eq.s32.totalorder %s29, 1
      %p141 = por %p139, %p140
      %p142 = scmp.ne.s32.totalorder %s131, %s132
      %p143 = scmp.eq.s32.totalorder %s29, 0
      %p144 = por %p142, %p143
      %p145 = scmp.ne.s32.totalorder %s131, %s132
      %p146 = scmp.eq.s32.totalorder %s30, 1
      %p147 = por %p145, %p146
      %p149 = scmp.ne.s32.totalorder %s132, %s148
      %p150 = scmp.eq.s32.totalorder %s30, 0
      %p151 = por %p149, %p150
      %s152 = ssub.s32 %s31, %s43
      %s153 = ssub.s32 %s32, %s39
      %s154 = sor.u32 %s152, %s153
      %p155 = scmp.eq.s32.totalorder %s154, 0
      %s157 = sadd.s32 %s156, 1
      %s158 = scalar_select %p155, %s156, %s157
      %p161 = pneg %p155
      %p162 = scmp.eq.s32.totalorder %s24, 1
      %p163 = por %p161, %p162
      %p164 = scmp.ne.s32.totalorder %s156, %s159
      %p165 = scmp.eq.s32.totalorder %s24, 0
      %p166 = por %p164, %p165
      %p167 = scmp.ne.s32.totalorder %s156, %s159
      %p168 = scmp.eq.s32.totalorder %s29, 1
      %p169 = por %p167, %p168
      %p170 = scmp.ne.s32.totalorder %s159, %s160
      %p171 = scmp.eq.s32.totalorder %s29, 0
      %p172 = por %p170, %p171
      %p173 = scmp.ne.s32.totalorder %s159, %s160
      %p174 = scmp.eq.s32.totalorder %s30, 1
      %p175 = por %p173, %p174
      %p177 = scmp.ne.s32.totalorder %s160, %s176
      %p178 = scmp.eq.s32.totalorder %s30, 0
      %p179 = por %p177, %p178
      %s180 = ssub.s32 %s31, %s43
      %s181 = ssub.s32 %s32, %s39
      %s182 = sor.u32 %s180, %s181
      %p183 = scmp.eq.s32.totalorder %s182, 0
      %s185 = sadd.s32 %s184, 1
      %s186 = scalar_select %p183, %s184, %s185
      %p189 = pneg %p183
      %p190 = scmp.eq.s32.totalorder %s24, 1
      %p191 = por %p189, %p190
      %p192 = scmp.ne.s32.totalorder %s184, %s187
      %p193 = scmp.eq.s32.totalorder %s24, 0
      %p194 = por %p192, %p193
      %p195 = scmp.ne.s32.totalorder %s184, %s187
      %p196 = scmp.eq.s32.totalorder %s29, 1
      %p197 = por %p195, %p196
      %p198 = scmp.ne.s32.totalorder %s187, %s188
      %p199 = scmp.eq.s32.totalorder %s29, 0
      %p200 = por %p198, %p199
      %p201 = scmp.ne.s32.totalorder %s187, %s188
      %p202 = scmp.eq.s32.totalorder %s30, 1
      %p203 = por %p201, %p202
      %p205 = scmp.ne.s32.totalorder %s188, %s204
      %p206 = scmp.eq.s32.totalorder %s30, 0
      %p207 = por %p205, %p206
      %p208 = scmp.le.s32.totalorder 1, %s24
      %p209 = scmp.lt.s32.totalorder %s24, 3
      %p210 = pnand %p208, %p209
      %p211 = pneg %p210
      // Predicated region
      $region9: #{tpu_custom_call.1} parent=5 // pred_check
        _
      $region10: #{tpu_custom_call.1} parent=5 // pred_check_branch
        %213 = sbr.rel (%p210) target = $region12
      $region11: #{tpu_custom_call.1} parent=5 // pred_region
        %s214 = ssub.s32 %s24, 1
      $region12: #{tpu_custom_call.1} parent=5 // pred_fallthru
        _
      %p215 = scmp.lt.s32.totalorder %s24, 2
      // Predicated region
      $region13: #{tpu_custom_call.1} parent=5 // pred_check
        %p216 = pneg %p215
      $region14: #{tpu_custom_call.1} parent=5 // pred_check_branch
        %218 = sbr.rel (%p216) target = $region16
      $region15: #{tpu_custom_call.1} parent=5 // pred_region
        // Predicated region
        $region17: #{tpu_custom_call.1} parent=15 // pred_check
          %p219 = pneg %p58
        $region18: #{tpu_custom_call.1} parent=15 // pred_check_branch
          %221 = sbr.rel (%p219) target = $region20
        $region19: #{tpu_custom_call.1} parent=15 // pred_region
          %s222 = sand.u32 %s48, 1
          %s223 = scalar_lea.sflag [#allocation3], %s222
          %s224 = sand.u32 %s48, 1
          %s225 = smul.addr %s224, 8
          %s226 = scalar_lea.vmem [#allocation2], %s225
          %s228 = ssub.s32 128, 128
          %229 = vsyncadd %s223, %s228
          %s230 = sadd.s32 %s32, %s31
          %s231 = smul.addr %s230, 128
          %s232 = scalar_lea.hbm %s0, %s231
          %s234 = sshll.u32 %s226, 4
          %s235 = int_to_ptr.vmem [resolvable:$true] %s234
          %237 = dma.hbm_to_vmem [thread:$0]  %s232, 128, %s235, %s223
        $region20: #{tpu_custom_call.1} parent=15 // pred_fallthru
          _
        // Predicated region
        $region21: #{tpu_custom_call.1} parent=15 // pred_check
          %p238 = pneg %p84
        $region22: #{tpu_custom_call.1} parent=15 // pred_check_branch
          %240 = sbr.rel (%p238) target = $region24
        $region23: #{tpu_custom_call.1} parent=15 // pred_region
          %s241 = sand.u32 %s24, 1
          %s242 = scalar_lea.sflag [#allocation6], %s241
          %s243 = sand.u32 %s74, 1
          %s244 = smul.addr %s243, 8
          %s245 = scalar_lea.vmem [#allocation5], %s244
          %s247 = ssub.s32 128, 128
          %248 = vsyncadd %s242, %s247
          %s249 = smul.addr %s31, 128
          %s250 = scalar_lea.hbm %s1, %s249
          %s252 = sshll.u32 %s245, 4
          %s253 = int_to_ptr.vmem [resolvable:$true] %s252
          %255 = dma.hbm_to_vmem [thread:$0]  %s250, 128, %s253, %s242
        $region24: #{tpu_custom_call.1} parent=15 // pred_fallthru
          _
        // Predicated region
        $region25: #{tpu_custom_call.1} parent=15 // pred_check
          %p256 = pneg %p110
        $region26: #{tpu_custom_call.1} parent=15 // pred_check_branch
          %258 = sbr.rel (%p256) target = $region28
        $region27: #{tpu_custom_call.1} parent=15 // pred_region
          %s259 = sand.u32 %s24, 1
          %s260 = scalar_lea.sflag [#allocation6], %s259
          %s261 = sand.u32 %s100, 1
          %s262 = smul.addr %s261, 8
          %s263 = scalar_lea.vmem [#allocation7], %s262
          %s265 = ssub.s32 128, 128
          %266 = vsyncadd %s260, %s265
          %s267 = smul.addr %s31, 128
          %s268 = scalar_lea.hbm %s2, %s267
          %s270 = sshll.u32 %s263, 4
          %s271 = int_to_ptr.vmem [resolvable:$true] %s270
          %273 = dma.hbm_to_vmem [thread:$0]  %s268, 128, %s271, %s260
        $region28: #{tpu_custom_call.1} parent=15 // pred_fallthru
          _
        // Predicated region
        $region29: #{tpu_custom_call.1} parent=15 // pred_check
          %p274 = pneg %p138
        $region30: #{tpu_custom_call.1} parent=15 // pred_check_branch
          %276 = sbr.rel (%p274) target = $region32
        $region31: #{tpu_custom_call.1} parent=15 // pred_region
          %p277 = scmp.lt.s32.totalorder %s31, 1
          %s278 = scalar_select %p277, %s31, 1
          %p279 = scmp.lt.s32.totalorder %s32, 0
          %s280 = scalar_select %p279, %s32, 0
          %s281 = sadd.s32 %s280, %s278
          %s282 = smul.addr %s281, 2
          %s283 = scalar_lea.vmem %s3, %s282
        $region32: #{tpu_custom_call.1} parent=15 // pred_fallthru
          _
      $region16: #{tpu_custom_call.1} parent=5 // pred_fallthru
        _
      %p284 = scmp.le.s32.totalorder 1, %s24
      %p285 = scmp.lt.s32.totalorder %s24, 3
      %p286 = pnand %p284, %p285
      %p287 = pneg %p286
      // Predicated region
      $region33: #{tpu_custom_call.1} parent=5 // pred_check
        _
      $region34: #{tpu_custom_call.1} parent=5 // pred_check_branch
        %289 = sbr.rel (%p286) target = $region36
      $region35: #{tpu_custom_call.1} parent=5 // pred_region
        %s290 = ssub.s32 %s24, 1
        %s291 = sand.u32 %s51, 1
        %s292 = scalar_lea.sflag [#allocation3], %s291
        %s293 = sand.u32 %s51, 1
        %s294 = smul.addr %s293, 8
        %s295 = scalar_lea.vmem [#allocation2], %s294
        // Predicated region
        $region37: #{tpu_custom_call.1} parent=35 // pred_check
          %p296 = pneg %p64
        $region38: #{tpu_custom_call.1} parent=35 // pred_check_branch
          %298 = sbr.rel (%p296) target = $region40
        $region39: #{tpu_custom_call.1} parent=35 // pred_region
          %299 = dma.done %s292, 128
        $region40: #{tpu_custom_call.1} parent=35 // pred_fallthru
          _
        %s300 = sand.u32 %s29, 1
        %s301 = scalar_lea.sflag [#allocation6], %s300
        %s302 = sand.u32 %s77, 1
        %s303 = smul.addr %s302, 8
        %s304 = scalar_lea.vmem [#allocation5], %s303
        // Predicated region
        $region41: #{tpu_custom_call.1} parent=35 // pred_check
          %p305 = pneg %p90
        $region42: #{tpu_custom_call.1} parent=35 // pred_check_branch
          %307 = sbr.rel (%p305) target = $region44
        $region43: #{tpu_custom_call.1} parent=35 // pred_region
          %308 = dma.done %s301, 128
        $region44: #{tpu_custom_call.1} parent=35 // pred_fallthru
          _
        %s309 = sand.u32 %s29, 1
        %s310 = scalar_lea.sflag [#allocation6], %s309
        %s311 = sand.u32 %s103, 1
        %s312 = smul.addr %s311, 8
        %s313 = scalar_lea.vmem [#allocation7], %s312
        // Predicated region
        $region45: #{tpu_custom_call.1} parent=35 // pred_check
          %p314 = pneg %p116
        $region46: #{tpu_custom_call.1} parent=35 // pred_check_branch
          %316 = sbr.rel (%p314) target = $region48
        $region47: #{tpu_custom_call.1} parent=35 // pred_region
          %317 = dma.done %s310, 128
        $region48: #{tpu_custom_call.1} parent=35 // pred_fallthru
          _
        %s318 = sand.u32 %s51, 1
        %s319 = scalar_lea.sflag [#allocation3], %s318
        %s320 = sand.u32 %s51, 1
        %s321 = smul.addr %s320, 8
        %s322 = scalar_lea.vmem [#allocation2], %s321
        %p323 = pneg %p64
        %p324 = pneg %p61
        %s325 = sand.u32 %s29, 1
        %s326 = scalar_lea.sflag [#allocation6], %s325
        %s327 = sand.u32 %s77, 1
        %s328 = smul.addr %s327, 8
        %s329 = scalar_lea.vmem [#allocation5], %s328
        %p330 = pneg %p90
        %p331 = pneg %p87
        %s332 = sand.u32 %s29, 1
        %s333 = scalar_lea.sflag [#allocation6], %s332
        %s334 = sand.u32 %s103, 1
        %s335 = smul.addr %s334, 8
        %s336 = scalar_lea.vmem [#allocation7], %s335
        %p337 = pneg %p116
        %p338 = pneg %p113
        %p339 = scmp.lt.s32.totalorder %s33, 1
        %s340 = scalar_select %p339, %s33, 1
        %p341 = scmp.lt.s32.totalorder %s34, 0
        %s342 = scalar_select %p341, %s34, 0
        %s343 = sadd.s32 %s342, %s340
        %s344 = smul.addr %s343, 2
        %s345 = scalar_lea.vmem %s3, %s344
        %p346 = pneg %p144
        %p347 = pneg %p141
        %p348 = pneg %p172
        %p349 = pneg %p169
        %s350 = sand.u32 %s159, 1
        %s351 = scalar_lea.sflag [#allocation4], %s350
        %s352 = sand.u32 %s159, 1
        %s353 = smul.addr %s352, 8
        %s354 = scalar_lea.vmem [#allocation8], %s353
        %p355 = pneg %p200
        %p356 = pneg %p197
        %s357 = sand.u32 %s187, 1
        %s358 = scalar_lea.sflag [#allocation10], %s357
        %s359 = sand.u32 %s187, 1
        %s360 = smul.addr %s359, 8
        %s361 = scalar_lea.vmem [#allocation9], %s360
        %p362 = scmp.lt.s32.totalorder %s33, 1
        %s363 = scalar_select %p362, %s33, 1
        %p364 = scmp.lt.s32.totalorder %s34, 0
        %s365 = scalar_select %p364, %s34, 0
        %s366 = sadd.s32 %s365, %s363
        %s367 = smul.addr %s366, 2
        %s368 = scalar_lea.vmem %s3, %s367
        %v372 = vld [vmem:[%s295] sm:$0xff]
        %v373 = vmul.f32 %v372, 0.0009765625
        %v374 = vpack.c.bf16 %v373, %v373
        %v375 = vld [vmem:[%s304] sm:$0xff]
        %v376 = vpack.c.bf16 %v375, %v375
        %vm377 = vcmask 261120
        %v379 = vsel %vm377, %v374, 0
        %v382 = vsel %vm377, %v376, 0
        %384 = vmatprep.subr.bf16.mxu0 0
        %385 = vmatpush1.bf16.xpose.msra.mxu0 %v382
        %386 = vmatprep.subr.bf16.mxu0 0
        %387 = vmatpush1.bf16.xpose.msra.mxu0 0
        %388 = vmatprep.subr.bf16.mxu0 0
        %389 = vmatpush1.bf16.xpose.msra.mxu0 0
        %390 = vmatprep.subr.bf16.mxu0 0
        %391 = vmatpush1.bf16.xpose.msra.mxu0 0
        %392 = vmatprep.subr.bf16.mxu0 0
        %393 = vmatpush1.bf16.xpose.msra.mxu0 0
        %394 = vmatprep.subr.bf16.mxu0 0
        %395 = vmatpush1.bf16.xpose.msra.mxu0 0
        %396 = vmatprep.subr.bf16.mxu0 0
        %397 = vmatpush1.bf16.xpose.msra.mxu0 0
        %398 = vmatprep.subr.bf16.mxu0 0
        %399 = vmatpush1.bf16.xpose.msra.mxu0 0
        %400 = vmatprep.subr.bf16.mxu0 0
        %401 = vmatpush1.bf16.xpose.msra.mxu0 0
        %402 = vmatprep.subr.bf16.mxu0 0
        %403 = vmatpush1.bf16.xpose.msra.mxu0 0
        %404 = vmatprep.subr.bf16.mxu0 0
        %405 = vmatpush1.bf16.xpose.msra.mxu0 0
        %406 = vmatprep.subr.bf16.mxu0 0
        %407 = vmatpush1.bf16.xpose.msra.mxu0 0
        %408 = vmatprep.subr.bf16.mxu0 0
        %409 = vmatpush1.bf16.xpose.msra.mxu0 0
        %410 = vmatprep.subr.bf16.mxu0 0
        %411 = vmatpush1.bf16.xpose.msra.mxu0 0
        %412 = vmatprep.subr.bf16.mxu0 0
        %413 = vmatpush1.bf16.xpose.msra.mxu0 0
        %414 = vmatprep.subr.bf16.mxu0 0
        %415 = vmatpush1.bf16.xpose.msra.mxu0 0
        %416 = vmatprep.mubr.bf16.mxu0 0
        %417 = vmatmul.mubr.bf16.gmra.mrb[0].mxu0 %v379
        %v418 = vpop.f32.mrb[0].mxu0
        %v419 = vadd.f32 0.0, %v418
        %v420 = vpop.f32.mrb[0].mxu0
        %v421 = vpop.f32.mrb[0].mxu0
        %v422 = vpop.f32.mrb[0].mxu0
        %423 = vdwg.mxu0
        %v424 = vld [vmem:[%s368] sm:$0x3]
        %vm425 = vnez %v424
        %v426 = vsel %vm425, 16843009, 0
        %v427 = vunpack.c.0.s8 %v426
        %vm428 = vcmp.ne.s32.totalorder %v427, 0
        %v429 = vsel %vm428, -1e+09, %v419
        %vm430 = vcmask 64512
        %v431 = vsel %vm430, %v429, -inf
        %432 = vmax.xlane.f32.xlu0 %v431
        %v433 = vpop.xlane.xlu0 %432
        %v434 = vsub.f32 %v429, %v433
        %v435 = vmul.f32 %v434, 1.442695
        %v436 = vpow.pop %v435
        %v437 = vsel %vm430, %v436, 0.0
        %438 = vadd.xlane.f32.xlu0 %v437
        %v439 = vpop.xlane.xlu0 %438
        %v440 = vrcp.pop %v439
        %v441 = vmul.f32 %v436, %v440
        %v442 = vpack.c.bf16 %v441, %v441
        %v443 = vld [vmem:[%s313] sm:$0xff]
        %v444 = vpack.c.bf16 %v443, %v443
        %v446 = vsel %vm430, %v442, 0
        %vm448 = vcmask 1043456
        %v450 = vsel %vm448, %v444, 0
        %452 = vmatprep.subr.bf16.mxu0 0
        %453 = vmatpush1.bf16.msra.mxu0 %v450
        %454 = vmatprep.subr.bf16.mxu0 0
        %455 = vmatpush1.bf16.msra.mxu0 0
        %456 = vmatprep.subr.bf16.mxu0 0
        %457 = vmatpush1.bf16.msra.mxu0 0
        %458 = vmatprep.subr.bf16.mxu0 0
        %459 = vmatpush1.bf16.msra.mxu0 0
        %460 = vmatprep.subr.bf16.mxu0 0
        %461 = vmatpush1.bf16.msra.mxu0 0
        %462 = vmatprep.subr.bf16.mxu0 0
        %463 = vmatpush1.bf16.msra.mxu0 0
        %464 = vmatprep.subr.bf16.mxu0 0
        %465 = vmatpush1.bf16.msra.mxu0 0
        %466 = vmatprep.subr.bf16.mxu0 0
        %467 = vmatpush1.bf16.msra.mxu0 0
        %468 = vmatprep.subr.bf16.mxu0 0
        %469 = vmatpush1.bf16.msra.mxu0 0
        %470 = vmatprep.subr.bf16.mxu0 0
        %471 = vmatpush1.bf16.msra.mxu0 0
        %472 = vmatprep.subr.bf16.mxu0 0
        %473 = vmatpush1.bf16.msra.mxu0 0
        %474 = vmatprep.subr.bf16.mxu0 0
        %475 = vmatpush1.bf16.msra.mxu0 0
        %476 = vmatprep.subr.bf16.mxu0 0
        %477 = vmatpush1.bf16.msra.mxu0 0
        %478 = vmatprep.subr.bf16.mxu0 0
        %479 = vmatpush1.bf16.msra.mxu0 0
        %480 = vmatprep.subr.bf16.mxu0 0
        %481 = vmatpush1.bf16.msra.mxu0 0
        %482 = vmatprep.subr.bf16.mxu0 0
        %483 = vmatpush1.bf16.msra.mxu0 0
        %484 = vmatprep.mubr.bf16.mxu0 0
        %485 = vmatmul.mubr.bf16.gmra.mrb[0].mxu0 %v446
        %v486 = vpop.f32.mrb[0].mxu0
        %v487 = vadd.f32 0.0, %v486
        %v488 = vpop.f32.mrb[0].mxu0
        %v489 = vpop.f32.mrb[0].mxu0
        %v490 = vpop.f32.mrb[0].mxu0
        %491 = vdwg.mxu0
        %492 = vst.msk [vmem:[%s354] sm:$0xff] %vm377, %v487
        %493 = vst.msk [vmem:[%s361] sm:$0xff] %vm430, %v441
        %s494 = sand.u32 %s159, 1
        %s495 = scalar_lea.sflag [#allocation4], %s494
        %s496 = sand.u32 %s159, 1
        %s497 = smul.addr %s496, 8
        %s498 = scalar_lea.vmem [#allocation8], %s497
        %s499 = sand.u32 %s187, 1
        %s500 = scalar_lea.sflag [#allocation10], %s499
        %s501 = sand.u32 %s187, 1
        %s502 = smul.addr %s501, 8
        %s503 = scalar_lea.vmem [#allocation9], %s502
        // Predicated region
        $region49: #{tpu_custom_call.1} parent=35 // pred_check
          %p504 = pneg %p169
        $region50: #{tpu_custom_call.1} parent=35 // pred_check_branch
          %506 = sbr.rel (%p504) target = $region52
        $region51: #{tpu_custom_call.1} parent=35 // pred_region
          %s508 = ssub.s32 128, 128
          %509 = vsyncadd %s495, %s508
          %s510 = sadd.s32 %s34, %s33
          %s511 = smul.addr %s510, 128
          %s512 = scalar_lea.hbm %s4, %s511
          %s514 = sshll.u32 %s498, 4
          %s515 = int_to_ptr.vmem [resolvable:$true] %s514
          %517 = dma.vmem_to_hbm [thread:$0]  %s515, 128, %s512, %s495
        $region52: #{tpu_custom_call.1} parent=35 // pred_fallthru
          _
        // Predicated region
        $region53: #{tpu_custom_call.1} parent=35 // pred_check
          %p518 = pneg %p197
        $region54: #{tpu_custom_call.1} parent=35 // pred_check_branch
          %520 = sbr.rel (%p518) target = $region56
        $region55: #{tpu_custom_call.1} parent=35 // pred_region
          %s522 = ssub.s32 128, 128
          %523 = vsyncadd %s500, %s522
          %s524 = sadd.s32 %s34, %s33
          %s525 = smul.addr %s524, 128
          %s526 = scalar_lea.hbm %s5, %s525
          %s528 = sshll.u32 %s503, 4
          %s529 = int_to_ptr.vmem [resolvable:$true] %s528
          %531 = dma.vmem_to_hbm [thread:$0]  %s529, 128, %s526, %s500
        $region56: #{tpu_custom_call.1} parent=35 // pred_fallthru
          _
      $region36: #{tpu_custom_call.1} parent=5 // pred_fallthru
        _
      %p532 = scmp.le.s32.totalorder 2, %s24
      // Predicated region
      $region57: #{tpu_custom_call.1} parent=5 // pred_check
        %p533 = pneg %p532
      $region58: #{tpu_custom_call.1} parent=5 // pred_check_branch
        %535 = sbr.rel (%p533) target = $region60
      $region59: #{tpu_custom_call.1} parent=5 // pred_region
        %s536 = ssub.s32 %s24, 2
        // Predicated region
        $region61: #{tpu_custom_call.1} parent=59 // pred_check
          %p537 = pneg %p175
        $region62: #{tpu_custom_call.1} parent=59 // pred_check_branch
          %539 = sbr.rel (%p537) target = $region64
        $region63: #{tpu_custom_call.1} parent=59 // pred_region
          %s540 = sand.u32 %s160, 1
          %s541 = scalar_lea.sflag [#allocation4], %s540
          %s542 = sand.u32 %s160, 1
          %s543 = smul.addr %s542, 8
          %s544 = scalar_lea.vmem [#allocation8], %s543
          %545 = dma.done %s541, 128
        $region64: #{tpu_custom_call.1} parent=59 // pred_fallthru
          _
        // Predicated region
        $region65: #{tpu_custom_call.1} parent=59 // pred_check
          %p546 = pneg %p203
        $region66: #{tpu_custom_call.1} parent=59 // pred_check_branch
          %548 = sbr.rel (%p546) target = $region68
        $region67: #{tpu_custom_call.1} parent=59 // pred_region
          %s549 = sand.u32 %s188, 1
          %s550 = scalar_lea.sflag [#allocation10], %s549
          %s551 = sand.u32 %s188, 1
          %s552 = smul.addr %s551, 8
          %s553 = scalar_lea.vmem [#allocation9], %s552
          %554 = dma.done %s550, 128
        $region68: #{tpu_custom_call.1} parent=59 // pred_fallthru
          _
      $region60: #{tpu_custom_call.1} parent=5 // pred_fallthru
        _
    $region6: #{tpu_custom_call.1} parent=1 // loop_footer
      %s28 = sadd.s32 1, %s24
    $region7: #{tpu_custom_call.1} parent=1 // loop_footer_branch
      %23 = sbr.rel target = $region3
    $region8: #{tpu_custom_call.1} parent=1 // loop_exit
      _
    %555 = vsyncpa [#allocation3], 1
    %s556 = scalar_lea.sflag [#allocation3], 1
    %557 = vsyncpa %s556, 1
    %558 = vsyncpa [#allocation6], 1
    %s559 = scalar_lea.sflag [#allocation6], 1
    %560 = vsyncpa %s559, 1
    %561 = vsyncpa [#allocation4], 1
    %s562 = scalar_lea.sflag [#allocation4], 1
    %563 = vsyncpa %s562, 1
    %564 = vsyncpa [#allocation10], 1
    %s565 = scalar_lea.sflag [#allocation10], 1
    %566 = vsyncpa %s565, 1

</llo_original>
